<compile_context>
chip_gen: v5e
topology: v5e:2x2
jax: 0.10.0
libtpu: 0.0.40
codegen_flags: <defaults>
</compile_context>

<pallas_src>
import jax
import jax.numpy as jnp
import numpy as np
from jax.experimental import pallas as pl
from jax.experimental.pallas import tpu as pltpu


def _random_model_kernel(x_ref, y_ref, o_ref):
    """One batch tile: o = x @ y (y = p @ r precomputed, VMEM-resident)."""
    o_ref[...] = jnp.dot(
        x_ref[...], y_ref[...], preferred_element_type=jnp.float32
    ).astype(o_ref.dtype)


def _pick_block_m(b: int, block_m: int) -> int:
    """Largest batch tile <= block_m that is a multiple of 8 (or the whole
    batch if b < 8, which is legal because it equals the full array dim)."""
    bm = min(block_m, b)
    bm = (bm // 8) * 8
    if bm == 0:
        bm = b  # b < 8: single block spanning the full (tiny) batch dim
    return bm


def random_model_forward(x: jax.Array, p: jax.Array, key: jax.Array,
                         *, block_m: int = 4096) -> jax.Array:
    """Pallas equivalent of RandomModel.forward: x @ (p @ randn(d, d))."""
    b, d = x.shape
    assert p.shape == (d, d)

    # Fresh random matrix per forward call (stand-in for torch.randn(d, d)).
    r = jax.random.normal(key, (d, d), dtype=p.dtype)
    # Hoisted: y = p @ r is a single tiny matmul, done once in the wrapper.
    y = jnp.dot(p, r, preferred_element_type=jnp.float32).astype(x.dtype)

    bm = _pick_block_m(b, block_m)
    grid = (pl.cdiv(b, bm),)

    return pl.pallas_call(
        _random_model_kernel,
        out_shape=jax.ShapeDtypeStruct((b, d), x.dtype),
        grid_spec=pltpu.PrefetchScalarGridSpec(
            num_scalar_prefetch=0,
            grid=grid,
            in_specs=[
                # x batch tiles: double-buffered, boundary block masked.
                pl.BlockSpec((bm, d), lambda i: (i, 0)),
                # y: single (d, d) tile, VMEM-resident across the whole grid.
                pl.BlockSpec((d, d), lambda i: (0, 0)),
            ],
            out_specs=pl.BlockSpec((bm, d), lambda i: (i, 0)),
        ),
        compiler_params=pltpu.CompilerParams(
            dimension_semantics=("parallel",)),
        cost_estimate=pl.CostEstimate(
            flops=2 * b * d * d,
            transcendentals=0,
            bytes_accessed=(2 * b * d + d * d) * x.dtype.itemsize,
        ),
    )(x, y)


def _check(batch: int, dim: int, key) -> None:
    k_x, k_p, k_r = jax.random.split(key, 3)
    x = jax.random.normal(k_x, (batch, dim), dtype=jnp.float32)
    p = jax.random.normal(k_p, (dim, dim), dtype=jnp.float32)  # nn.Parameter

    out = random_model_forward(x, p, k_r)
    out = jax.block_until_ready(out)
    assert out.shape == (batch, dim)

    # Reference in float64 with the same random matrix the kernel used.
    r = jax.random.normal(k_r, (dim, dim), dtype=jnp.float32)
    ref = np.asarray(x, np.float64) @ (np.asarray(p, np.float64)
                                       @ np.asarray(r, np.float64))
    rel_err = (np.max(np.abs(np.asarray(out, np.float64) - ref))
               / np.max(np.abs(ref)))
    assert rel_err < 1e-3, f"relative error too large: {rel_err}"


if __name__ == "__main__":
    key = jax.random.PRNGKey(0)
    k0, k1 = jax.random.split(key)

    # Module fixes the feature dim at 100 via its (100, 100) parameter.
    _check(batch=8, dim=100, key=k0)    # single-tile path
    _check(batch=20, dim=100, key=k1)   # multi-tile path with masked boundary

    print("KERNEL_OK")
</pallas_src>

<mosaic_0001>
module attributes {stable_mosaic.version = 11 : i64} {
  func.func @_random_model_kernel(%arg0: i32, %arg1: memref<8x100xf32, #tpu.memory_space<vmem>>, %arg2: memref<100x100xf32, #tpu.memory_space<vmem>>, %arg3: memref<8x100xf32, #tpu.memory_space<vmem>>) attributes {dimension_semantics = [#tpu.dimension_semantics<parallel>], iteration_bounds = array<i64: 1>, scalar_prefetch = 0 : i64, scratch_operands = 0 : i64, tpu.core_type = #tpu.core_type<tc>, window_params = [{transform_indices = @transform_0, window_bounds = array<i64: 8, 100>}, {pipeline_mode = #tpu.pipeline_mode<synchronous>, transform_indices = @transform_1, window_bounds = array<i64: 100, 100>}, {transform_indices = @transform_2, window_bounds = array<i64: 8, 100>}]} {
    %c0 = arith.constant 0 : index
    %c0_0 = arith.constant 0 : index
    %0 = vector.load %arg1[%c0, %c0_0] : memref<8x100xf32, #tpu.memory_space<vmem>>, vector<8x100xf32>
    %c0_1 = arith.constant 0 : index
    %c0_2 = arith.constant 0 : index
    %1 = vector.load %arg2[%c0_1, %c0_2] : memref<100x100xf32, #tpu.memory_space<vmem>>, vector<100x100xf32>
    %cst = arith.constant dense<0.000000e+00> : vector<8x100xf32>
    %2 = tpu.matmul %0, %1, %cst {dimension_numbers = #tpu.dot_dimension_numbers<[1], [0], [0], [1], [0, 0, 1, 1], [], []>} : vector<8x100xf32>, vector<100x100xf32>, vector<8x100xf32> -> vector<8x100xf32>
    %c0_3 = arith.constant 0 : index
    %c0_4 = arith.constant 0 : index
    %3 = vector.load %arg3[%c0_3, %c0_4] : memref<8x100xf32, #tpu.memory_space<vmem>>, vector<8x100xf32>
    tpu.vector_store %arg3[%c0_3, %c0_4], %2 {strides = array<i32>} : memref<8x100xf32, #tpu.memory_space<vmem>>, vector<8x100xf32>,
    return
  }
  func.func @transform_0(%arg0: i32) -> (i32, i32) {
    %c0_i32 = arith.constant 0 : i32
    %c0_i32_0 = arith.constant 0 : i32
    return %arg0, %c0_i32 : i32, i32
  }
  func.func @transform_1(%arg0: i32) -> (i32, i32) {
    %c0_i32 = arith.constant 0 : i32
    %c0_i32_0 = arith.constant 0 : i32
    %c0_i32_1 = arith.constant 0 : i32
    return %c0_i32, %c0_i32_0 : i32, i32
  }
  func.func @transform_2(%arg0: i32) -> (i32, i32) {
    %c0_i32 = arith.constant 0 : i32
    %c0_i32_0 = arith.constant 0 : i32
    return %arg0, %c0_i32 : i32, i32
  }
}

</mosaic_0001>

<llo_original>
// kernel: tpu_custom_call.1
$region0: #{tpu_custom_call.1}
  #allocation0 [shape = 'u32[]', space=smem, size = 0x4, offset = 0x4, fixed_abs, tag = 'smem constant byte address 0x4 - core index']
  #allocation1 [shape = 'u32[72,128]{1,0:T(1,128)}', space=vmem, size = 0x9000, scoped, tag = 'internal scratch']
  %s0 = inlined_call_operand.hbm [shape: f32[8,100], index: 0, kind: input, shape index: {}]
  %s1 = inlined_call_operand.hbm [shape: f32[100,100], index: 1, kind: input, shape index: {}]
  %s2 = inlined_call_operand.hbm [shape: f32[8,100], index: 2, kind: output, shape index: {}]
  %s3 = sld [smem:[#allocation0]]
  $region26: #{tpu_custom_call.1} parent=0
    _
  %s5 = ssub.s32 1, %s3
  %s6 = scalar_select 0, %s5, %s3
  $region1: #{tpu_custom_call.1} parent=0
    #allocation2 [shape = 'u8[4096]{0}', space=vmem, size = 0x1000, scoped, tag = 'input window, operand 0, single buffered']
    #allocation3 [shape = 's32[1]{0}', space=sflag, size = 0x4, scoped, tag = 'scoped memory for tpu_custom_call.1']
    #allocation4 [shape = 's32[1]{0}', space=sflag, size = 0x4, scoped, tag = 'scoped memory for tpu_custom_call.1']
    #allocation5 [shape = 'u8[53248]{0}', space=vmem, size = 0xd000, scoped, tag = 'input window, operand 1, single buffered']
    #allocation6 [shape = 's32[1]{0}', space=sflag, size = 0x4, scoped, tag = 'scoped memory for tpu_custom_call.1']
    #allocation7 [shape = 'u8[4096]{0}', space=vmem, size = 0x1000, scoped, tag = 'output window, operand 0, single buffered']
    %7 = vsyncpa [#allocation3], 0
    %8 = vsyncpa [#allocation6], 0
    %9 = vsyncpa [#allocation4], 0
    // Predicated region
    $region2: #{tpu_custom_call.1} parent=1 // pred_check
      _
    $region3: #{tpu_custom_call.1} parent=1 // pred_check_branch
      %11 = sbr.rel (0) target = $region5
    $region4: #{tpu_custom_call.1} parent=1 // pred_region
      %13 = vsyncadd [#allocation3], 0
      %s15 = sshll.u32 %s0, 4
      %s16 = int_to_ptr.hbm [resolvable:$true] %s15
      %s17 = sshll.u32 [#allocation2], 4
      %s18 = int_to_ptr.vmem [resolvable:$true] %s17
      %20 = dma.hbm_to_vmem [thread:$0]  %s16, 128, %s18, [#allocation3]
    $region5: #{tpu_custom_call.1} parent=1 // pred_fallthru
      _
    // Predicated region
    $region6: #{tpu_custom_call.1} parent=1 // pred_check
      _
    $region7: #{tpu_custom_call.1} parent=1 // pred_check_branch
      %22 = sbr.rel (0) target = $region9
    $region8: #{tpu_custom_call.1} parent=1 // pred_region
      %24 = vsyncadd [#allocation6], 0
      %s25 = sshll.u32 %s1, 4
      %s26 = int_to_ptr.hbm [resolvable:$true] %s25
      %s27 = sshll.u32 [#allocation5], 4
      %s28 = int_to_ptr.vmem [resolvable:$true] %s27
      %33 = dma.hbm_to_vmem [thread:$0]  %s26, 1664, %s28, [#allocation6], 128, 128, 8
    $region9: #{tpu_custom_call.1} parent=1 // pred_fallthru
      _
    // Predicated region
    $region10: #{tpu_custom_call.1} parent=1 // pred_check
      _
    $region11: #{tpu_custom_call.1} parent=1 // pred_check_branch
      %35 = sbr.rel (0) target = $region13
    $region12: #{tpu_custom_call.1} parent=1 // pred_region
      %37 = dma.done [#allocation3], 128
    $region13: #{tpu_custom_call.1} parent=1 // pred_fallthru
      _
    // Predicated region
    $region14: #{tpu_custom_call.1} parent=1 // pred_check
      _
    $region15: #{tpu_custom_call.1} parent=1 // pred_check_branch
      %39 = sbr.rel (0) target = $region17
    $region16: #{tpu_custom_call.1} parent=1 // pred_region
      %41 = dma.done [#allocation6], 1664
    $region17: #{tpu_custom_call.1} parent=1 // pred_fallthru
      _
    %v42 = vld [vmem:[#allocation2] sm:$0xff]
    %v43 = vld [vmem:[#allocation5] sm:$0xff]
    %v44 = vld [vmem:[#allocation5 + $0x8] sm:$0xff]
    %v45 = vld [vmem:[#allocation5 + $0x10] sm:$0xff]
    %v46 = vld [vmem:[#allocation5 + $0x18] sm:$0xff]
    %v47 = vld [vmem:[#allocation5 + $0x20] sm:$0xff]
    %v48 = vld [vmem:[#allocation5 + $0x28] sm:$0xff]
    %v49 = vld [vmem:[#allocation5 + $0x30] sm:$0xff]
    %v50 = vld [vmem:[#allocation5 + $0x38] sm:$0xff]
    %v51 = vld [vmem:[#allocation5 + $0x40] sm:$0xff]
    %v52 = vld [vmem:[#allocation5 + $0x48] sm:$0xff]
    %v53 = vld [vmem:[#allocation5 + $0x50] sm:$0xff]
    %v54 = vld [vmem:[#allocation5 + $0x58] sm:$0xff]
    %v55 = vld [vmem:[#allocation5 + $0x60] sm:$0xf]
    %vm56 = vcmask 818176
    %v58 = vsel %vm56, %v42, 0
    %vm60 = vcmask 1043456
    %v62 = vsel %vm60, %v55, 0
    %64 = vmatpush.msra.mxu0 0.0
    %65 = vmatpush.msra.mxu0 0.0
    %66 = vmatpush.msra.mxu0 0.0
    %67 = vmatpush.msra.mxu0 %v62
    %68 = vmatpush.msra.mxu0 %v54
    %69 = vmatpush.msra.mxu0 %v53
    %70 = vmatpush.msra.mxu0 %v52
    %71 = vmatpush.msra.mxu0 %v51
    %72 = vmatpush.msra.mxu0 %v50
    %73 = vmatpush.msra.mxu0 %v49
    %74 = vmatpush.msra.mxu0 %v48
    %75 = vmatpush.msra.mxu0 %v47
    %76 = vmatpush.msra.mxu0 %v46
    %77 = vmatpush.msra.mxu0 %v45
    %78 = vmatpush.msra.mxu0 %v44
    %79 = vmatpush.msra.mxu0 %v43
    %80 = vmatmul.f32.gmra.mxu0 %v58
    %v81 = vpop.f32.mrf.mxu0
    %v82 = vadd.f32 0.0, %v81
    %83 = vdwg.mxu0
    %84 = vst.msk [vmem:[#allocation7] sm:$0xff] %vm56, %v82
    // Predicated region
    $region18: #{tpu_custom_call.1} parent=1 // pred_check
      _
    $region19: #{tpu_custom_call.1} parent=1 // pred_check_branch
      %86 = sbr.rel (0) target = $region21
    $region20: #{tpu_custom_call.1} parent=1 // pred_region
      %88 = vsyncadd [#allocation4], 0
      %s90 = sshll.u32 [#allocation7], 4
      %s91 = int_to_ptr.vmem [resolvable:$true] %s90
      %s92 = sshll.u32 %s2, 4
      %s93 = int_to_ptr.hbm [resolvable:$true] %s92
      %95 = dma.vmem_to_hbm [thread:$0]  %s91, 128, %s93, [#allocation4]
    $region21: #{tpu_custom_call.1} parent=1 // pred_fallthru
      _
    // Predicated region
    $region22: #{tpu_custom_call.1} parent=1 // pred_check
      _
    $region23: #{tpu_custom_call.1} parent=1 // pred_check_branch
      %97 = sbr.rel (0) target = $region25
    $region24: #{tpu_custom_call.1} parent=1 // pred_region
      %99 = dma.done [#allocation4], 128
    $region25: #{tpu_custom_call.1} parent=1 // pred_fallthru
      _
    %100 = vsyncpa [#allocation3], 1
    %101 = vsyncpa [#allocation6], 1
    %102 = vsyncpa [#allocation4], 1

</llo_original>
